<compile_context>
chip_gen: v7x
topology: tpu7x:2x2x1
jax: 0.10.0
libtpu: 0.0.40
codegen_flags: <defaults>
</compile_context>

<pallas_src>
import jax
import jax.numpy as jnp
from jax.experimental import pallas as pl
from jax.experimental.pallas import tpu as pltpu

_LANE = 128
_MAX_BLOCK_BYTES = 4 * 1024 * 1024     # per-buffer block cap; x4 when double-buffered in+out
_VMEM_LIMIT_BYTES = 32 * 1024 * 1024   # raise scoped VMEM (v5e default 16 MiB); < v7x 64 MiB physical
_MIN_SPLIT_BYTES = 2 * 1024 * 1024     # above this, force >=2 grid blocks (v7x dual-TC streaming)
_SUBLANE = {4: 8, 2: 16, 1: 32}        # native sublane multiple per dtype itemsize


def _gaussian_act_kernel(x_ref, o_ref):
    # Elementwise hot path: exp(-2 * x). Mul -> VALU slot, exp -> EUP slot;
    # kernel is HBM-bound so compute is free filler.
    x = x_ref[...]
    o_ref[...] = jnp.exp(x * jnp.asarray(-2.0, dtype=x.dtype))


def _run_2d(x2d, tile_rows):
    rows, cols = x2d.shape
    itemsize = jnp.dtype(x2d.dtype).itemsize
    n = rows * cols
    grid = (rows // tile_rows,)  # tile_rows always divides rows -> no ragged block
    return pl.pallas_call(
        _gaussian_act_kernel,
        out_shape=jax.ShapeDtypeStruct((rows, cols), x2d.dtype),
        grid_spec=pltpu.PrefetchScalarGridSpec(
            num_scalar_prefetch=0,
            grid=grid,
            in_specs=[pl.BlockSpec((tile_rows, cols), lambda i: (i, 0))],
            out_specs=pl.BlockSpec((tile_rows, cols), lambda i: (i, 0)),
        ),
        compiler_params=pltpu.CompilerParams(
            dimension_semantics=("parallel",),
            vmem_limit_bytes=_VMEM_LIMIT_BYTES,
        ),
        cost_estimate=pl.CostEstimate(
            flops=n, transcendentals=n, bytes_accessed=2 * n * itemsize),
    )(x2d)


def _pick_tile_rows(rows, cols, itemsize):
    """Largest tile_rows that divides rows, is sublane-aligned, fits the block
    budget, and (for >2 MiB tensors) leaves >=2 grid blocks for v7x's two TCs."""
    sublane = _SUBLANE.get(itemsize, 8)
    total_bytes = rows * cols * itemsize
    max_rows = max(sublane,
                   ((_MAX_BLOCK_BYTES // (cols * itemsize)) // sublane) * sublane)
    min_blocks = 2 if total_bytes > _MIN_SPLIT_BYTES else 1

    if rows % sublane != 0:
        # Can't form aligned row tiles; full-extent single block is always legal
        # (only happens for small tensors given the cols choices below).
        return rows

    units = rows // sublane
    best = None
    for d in range(1, units + 1):
        if units % d == 0:
            tr = d * sublane
            if tr <= max_rows and (units // d) >= min_blocks:
                best = tr  # keep scanning upward -> ends at the largest valid tile
    return best if best is not None else rows


def _choose_layout(n, itemsize):
    """Pick (cols, rows, tile_rows) with cols a wide multiple of 128 dividing n."""
    for cols in (2048, 1024, 512, 256, 128):
        if n % cols == 0:
            rows = n // cols
            return cols, rows, _pick_tile_rows(rows, cols, itemsize)
    return None


def gaussian_activation(x):
    """Computes exp(-2 * x), matching GaussianActivation.forward exactly."""
    orig_shape = x.shape
    orig_dtype = x.dtype
    n = x.size
    itemsize = jnp.dtype(orig_dtype).itemsize

    if n == 0:
        return jnp.exp(x * jnp.asarray(-2.0, dtype=orig_dtype))

    layout = _choose_layout(n, itemsize)
    if layout is not None:
        # Common path: free reshape, no padding, no extra HBM copies.
        cols, rows, tile_rows = layout
        return _run_2d(x.reshape(rows, cols), tile_rows).reshape(orig_shape)

    # Ragged fallback (n not a multiple of 128): bulk through the kernel,
    # tiny (<128-element) tail via plain jnp.exp. Avoids pad/slice HBM traffic.
    flat = x.reshape(-1)
    bulk_n = (n // _LANE) * _LANE
    parts = []
    if bulk_n:
        cols, rows, tile_rows = _choose_layout(bulk_n, itemsize)
        parts.append(_run_2d(flat[:bulk_n].reshape(rows, cols), tile_rows).reshape(-1))
    tail = flat[bulk_n:]
    parts.append(jnp.exp(tail * jnp.asarray(-2.0, dtype=orig_dtype)))
    return jnp.concatenate(parts).reshape(orig_shape)


if __name__ == "__main__":
    key = jax.random.PRNGKey(0)

    # NCHW input, matching the PyTorch conv conventions of the surrounding file.
    x = jax.random.normal(key, (2, 4, 16, 16), dtype=jnp.float32)
    y = gaussian_activation(x)
    jax.block_until_ready(y)
    y_ref = jnp.exp(-2.0 * x)
    assert y.shape == x.shape and y.dtype == x.dtype
    assert jnp.allclose(y, y_ref, rtol=1e-6, atol=1e-6)

    # Ragged path (size not a multiple of 128): bulk kernel + jnp tail.
    x2 = jax.random.normal(jax.random.PRNGKey(1), (3, 5, 7, 9), dtype=jnp.float32)
    y2 = gaussian_activation(x2)
    jax.block_until_ready(y2)
    assert jnp.allclose(y2, jnp.exp(-2.0 * x2), rtol=1e-6, atol=1e-6)

    # Multi-block path (>2 MiB -> grid of >=2, exercises the parallel axis).
    x3 = jax.random.normal(jax.random.PRNGKey(2), (4, 16, 64, 64), dtype=jnp.float32)
    y3 = gaussian_activation(x3)
    jax.block_until_ready(y3)
    assert jnp.allclose(y3, jnp.exp(-2.0 * x3), rtol=1e-6, atol=1e-6)

    print("KERNEL_OK")
</pallas_src>

<mosaic_0001>
module attributes {stable_mosaic.version = 11 : i64} {
  func.func @_gaussian_act_kernel(%arg0: i32, %arg1: memref<1x2048xf32, #tpu.memory_space<vmem>>, %arg2: memref<1x2048xf32, #tpu.memory_space<vmem>>) attributes {dimension_semantics = [#tpu.dimension_semantics<parallel>], iteration_bounds = array<i64: 1>, scalar_prefetch = 0 : i64, scratch_operands = 0 : i64, tpu.core_type = #tpu.core_type<tc>, window_params = [{transform_indices = @transform_0, window_bounds = array<i64: 1, 2048>}, {transform_indices = @transform_1, window_bounds = array<i64: 1, 2048>}]} {
    %c0 = arith.constant 0 : index
    %c0_0 = arith.constant 0 : index
    %0 = vector.load %arg1[%c0, %c0_0] : memref<1x2048xf32, #tpu.memory_space<vmem>>, vector<1x2048xf32>
    %cst = arith.constant -2.000000e+00 : f32
    %1 = vector.broadcast %cst : f32 to vector<1x2048xf32>
    %2 = arith.mulf %0, %1 : vector<1x2048xf32>
    %3 = math.exp %2 : vector<1x2048xf32>
    %c0_1 = arith.constant 0 : index
    %c0_2 = arith.constant 0 : index
    %4 = vector.load %arg2[%c0_1, %c0_2] : memref<1x2048xf32, #tpu.memory_space<vmem>>, vector<1x2048xf32>
    tpu.vector_store %arg2[%c0_1, %c0_2], %3 {strides = array<i32>} : memref<1x2048xf32, #tpu.memory_space<vmem>>, vector<1x2048xf32>,
    return
  }
  func.func @transform_0(%arg0: i32) -> (i32, i32) {
    %c0_i32 = arith.constant 0 : i32
    %c0_i32_0 = arith.constant 0 : i32
    return %arg0, %c0_i32 : i32, i32
  }
  func.func @transform_1(%arg0: i32) -> (i32, i32) {
    %c0_i32 = arith.constant 0 : i32
    %c0_i32_0 = arith.constant 0 : i32
    return %arg0, %c0_i32 : i32, i32
  }
}

</mosaic_0001>

<llo_original>
// kernel: tpu_custom_call.1
$region0: #{tpu_custom_call.1}
  #allocation0 [shape = 'u32[]', space=smem, size = 0x4, offset = 0x4, fixed_abs, tag = 'smem constant byte address 0x4 - core index']
  #allocation1 [shape = 'u32[144,128]{1,0:T(1,128)}', space=vmem, size = 0x12000, scoped, tag = 'internal scratch']
  %s0 = inlined_call_operand.hbm [shape: f32[1,2048], index: 0, kind: input, shape index: {}]
  %s1 = inlined_call_operand.hbm [shape: f32[1,2048], index: 1, kind: output, shape index: {}]
  %s2 = sld [smem:[#allocation0]]
  $region18: #{tpu_custom_call.1} parent=0
    _
  %s4 = ssub.s32 1, %s2
  %s5 = scalar_select 0, %s4, %s2
  $region1: #{tpu_custom_call.1} parent=0
    #allocation2 [shape = 'u8[8192]{0}', space=vmem, size = 0x2000, scoped, tag = 'input window, operand 0, single buffered']
    #allocation3 [shape = 's32[1]{0}', space=sflag, size = 0x4, scoped, tag = 'scoped memory for tpu_custom_call.1']
    #allocation4 [shape = 's32[1]{0}', space=sflag, size = 0x4, scoped, tag = 'scoped memory for tpu_custom_call.1']
    #allocation5 [shape = 'u8[8192]{0}', space=vmem, size = 0x2000, scoped, tag = 'output window, operand 0, single buffered']
    %6 = vsyncpa [#allocation3], 0
    %7 = vsyncpa [#allocation4], 0
    // Predicated region
    $region2: #{tpu_custom_call.1} parent=1 // pred_check
      _
    $region3: #{tpu_custom_call.1} parent=1 // pred_check_branch
      %9 = sbr.rel (0) target = $region5
    $region4: #{tpu_custom_call.1} parent=1 // pred_region
      %s11 = ssub.s32 256, 256
      %12 = vsyncadd [#allocation3], %s11
      %s14 = sshll.u32 [#allocation2], 4
      %s15 = int_to_ptr.vmem [resolvable:$true] %s14
      %17 = dma.hbm_to_vmem [thread:$0]  %s0, 256, %s15, [#allocation3]
    $region5: #{tpu_custom_call.1} parent=1 // pred_fallthru
      _
    // Predicated region
    $region6: #{tpu_custom_call.1} parent=1 // pred_check
      _
    $region7: #{tpu_custom_call.1} parent=1 // pred_check_branch
      %19 = sbr.rel (0) target = $region9
    $region8: #{tpu_custom_call.1} parent=1 // pred_region
      %20 = dma.done [#allocation3], 256
    $region9: #{tpu_custom_call.1} parent=1 // pred_fallthru
      _
    %v21 = vld [vmem:[#allocation2] sm:$0xff]
    %v22 = vld [vmem:[#allocation2 + $0x8] sm:$0xff]
    %v23 = vmul.f32 %v21, -2.0
    %v24 = vmul.f32 %v22, -2.0
    %v25 = vmul.f32 %v23, 1.442695
    %v26 = vpow.pop %v25
    %v27 = vmul.f32 %v24, 1.442695
    %v28 = vpow.pop %v27
    %29 = vst [vmem:[#allocation5] sm:$0xff] %v26
    %30 = vst [vmem:[#allocation5 + $0x8] sm:$0xff] %v28
    // Predicated region
    $region10: #{tpu_custom_call.1} parent=1 // pred_check
      _
    $region11: #{tpu_custom_call.1} parent=1 // pred_check_branch
      %32 = sbr.rel (0) target = $region13
    $region12: #{tpu_custom_call.1} parent=1 // pred_region
      %s34 = ssub.s32 256, 256
      %35 = vsyncadd [#allocation4], %s34
      %s37 = sshll.u32 [#allocation5], 4
      %s38 = int_to_ptr.vmem [resolvable:$true] %s37
      %40 = dma.vmem_to_hbm [thread:$0]  %s38, 256, %s1, [#allocation4]
    $region13: #{tpu_custom_call.1} parent=1 // pred_fallthru
      _
    // Predicated region
    $region14: #{tpu_custom_call.1} parent=1 // pred_check
      _
    $region15: #{tpu_custom_call.1} parent=1 // pred_check_branch
      %42 = sbr.rel (0) target = $region17
    $region16: #{tpu_custom_call.1} parent=1 // pred_region
      %43 = dma.done [#allocation4], 256
    $region17: #{tpu_custom_call.1} parent=1 // pred_fallthru
      _
    %44 = vsyncpa [#allocation3], 1
    %45 = vsyncpa [#allocation4], 1

</llo_original>
